<compile_context>
chip_gen: v7x
topology: tpu7x:2x2x1
jax: 0.10.0
libtpu: 0.0.40
codegen_flags: <defaults>
</compile_context>

<pallas_src>
import functools

import jax
import jax.numpy as jnp
from jax import lax
from jax.experimental import pallas as pl
from jax.experimental.pallas import tpu as pltpu


def _encoder_kernel(x_ref, w1_ref, b1_ref, w2_ref, b2_ref, out_ref, *, z_dim):
    x = x_ref[...]                                      # (TILE_B, sim_dim)

    # Linear 1 (weights pre-transposed to (in, out)) + LeakyReLU(0.1).
    h = jnp.dot(x, w1_ref[...], preferred_element_type=jnp.float32) + b1_ref[...]
    h = jnp.where(h >= 0.0, h, 0.1 * h)

    # Linear 2 -> packed params (TILE_B, 2*z_dim).
    p = jnp.dot(h.astype(w2_ref.dtype), w2_ref[...],
                preferred_element_type=jnp.float32) + b2_ref[...]

    # softplus(.) + 1e-7 only on the sigma lanes (col >= z_dim); mu lanes pass through.
    col = lax.broadcasted_iota(jnp.int32, p.shape, dimension=1)
    sp = jnp.logaddexp(p, 0.0) + 1e-7                   # numerically-stable softplus
    out_ref[...] = jnp.where(col >= z_dim, sp, p).astype(out_ref.dtype)


def encoder_forward(x, w1, b1, w2, b2, z_dim, *, tile_b=8192, stream_dtype=None):
    """x: (B, sim_dim).  w1: (sim_dim, sim_dim), b1: (sim_dim,),
    w2: (2*z_dim, sim_dim), b2: (2*z_dim,)  (PyTorch nn.Linear (out, in) layout).
    Returns (mu, sigma), each (B, z_dim) float32."""
    B, sim_dim = x.shape
    out_dim = 2 * z_dim

    # One-time layout change in the wrapper: (out, in) -> (in, out).  The weights are
    # resident across all grid steps, so this transpose is paid exactly once.
    w1t = jnp.asarray(w1).T                              # (sim_dim, sim_dim)
    w2t = jnp.asarray(w2).T                              # (sim_dim, out_dim)
    b1_2d = jnp.asarray(b1, jnp.float32).reshape(1, sim_dim)
    b2_2d = jnp.asarray(b2, jnp.float32).reshape(1, out_dim)

    x = jnp.asarray(x)
    if stream_dtype is not None:                         # optional bf16 input streaming
        x = x.astype(stream_dtype)
        w1t = w1t.astype(stream_dtype)
        w2t = w2t.astype(stream_dtype)

    # ---- Batch tile selection (no full-array padding) -------------------------------
    tile_b = max(8, (int(tile_b) // 8) * 8)
    if B <= tile_b:
        if B >= 2048:
            # Split into 2 grid steps so the "parallel" axis can use both v7x cores.
            tile_b = ((pl.cdiv(B, 2) + 7) // 8) * 8
        else:
            tile_b = B                                   # single full-array block
    grid = (pl.cdiv(B, tile_b),)                         # ragged last block is masked

    # ---- VMEM budget: streamed I/O (double buffered) + f32 intermediates + params ---
    x_itm = jnp.dtype(x.dtype).itemsize
    w_itm = jnp.dtype(w1t.dtype).itemsize
    x_tile_bytes = tile_b * sim_dim * x_itm
    out_tile_bytes = tile_b * out_dim * 4
    interm_bytes = tile_b * sim_dim * 4 + tile_b * out_dim * 4       # h and p in f32
    param_bytes = (w1t.size + w2t.size) * w_itm + (sim_dim + out_dim) * 4
    vmem_need = 2 * x_tile_bytes + 2 * out_tile_bytes + interm_bytes + 2 * param_bytes
    vmem_limit = int(min(max(2 * vmem_need, 32 << 20), 48 << 20))    # 48 MiB cap (v7x)

    resident = lambda shape: pl.BlockSpec(shape, lambda i: (0, 0))
    in_specs = [
        pl.BlockSpec((tile_b, sim_dim), lambda i: (i, 0)),   # streamed x tiles
        resident((sim_dim, sim_dim)),                        # w1t (stays in VMEM)
        resident((1, sim_dim)),                              # b1
        resident((sim_dim, out_dim)),                        # w2t
        resident((1, out_dim)),                              # b2
    ]

    kernel = functools.partial(_encoder_kernel, z_dim=z_dim)

    packed = pl.pallas_call(
        kernel,
        out_shape=jax.ShapeDtypeStruct((B, out_dim), jnp.float32),
        grid=grid,
        in_specs=in_specs,
        out_specs=pl.BlockSpec((tile_b, out_dim), lambda i: (i, 0)),
        compiler_params=pltpu.CompilerParams(
            dimension_semantics=("parallel",),
            vmem_limit_bytes=vmem_limit,
        ),
    )(x, w1t, b1_2d, w2t, b2_2d)

    mu = packed[:, :z_dim]
    sigma = packed[:, z_dim:]
    return mu, sigma


def _reference(x, w1, b1, w2, b2, z_dim):
    h = x @ w1.T + b1
    h = jnp.where(h >= 0.0, h, 0.1 * h)
    p = h @ w2.T + b2
    mu = p[:, :z_dim]
    sigma = jax.nn.softplus(p[:, z_dim:]) + 1e-7
    return mu, sigma


if __name__ == "__main__":
    # TODO(synk): Independent(Normal(mu, sigma), 1) has no Pallas equivalent; the
    # kernel returns the (mu, sigma) tensors that parameterize the distribution.
    z_dim = 2
    sim_dim = 64

    key = jax.random.PRNGKey(0)
    kx, k1, kb1, k2, kb2 = jax.random.split(key, 5)

    bound1 = 1.0 / (sim_dim ** 0.5)
    w1 = jax.random.uniform(k1, (sim_dim, sim_dim), jnp.float32, -bound1, bound1)
    b1 = jax.random.uniform(kb1, (sim_dim,), jnp.float32, -bound1, bound1)
    w2 = jax.random.uniform(k2, (2 * z_dim, sim_dim), jnp.float32, -bound1, bound1)
    b2 = jax.random.uniform(kb2, (2 * z_dim,), jnp.float32, -bound1, bound1)

    # Check 1: small batch (not a multiple of 8) -> single full-array block path.
    B = 10
    x = jax.random.normal(kx, (B, sim_dim), dtype=jnp.float32)
    mu, sigma = encoder_forward(x, w1, b1, w2, b2, z_dim)
    jax.block_until_ready((mu, sigma))
    mu_ref, sigma_ref = _reference(x, w1, b1, w2, b2, z_dim)
    assert mu.shape == (B, z_dim) and sigma.shape == (B, z_dim)
    assert jnp.allclose(mu, mu_ref, atol=1e-5, rtol=1e-5)
    assert jnp.allclose(sigma, sigma_ref, atol=1e-5, rtol=1e-5)
    assert bool(jnp.all(sigma > 0.0))

    # Check 2: multi-step grid with a ragged (masked) last block, no padding copy.
    B2 = 300
    x2 = jax.random.normal(kx, (B2, sim_dim), dtype=jnp.float32)
    mu2, sigma2 = encoder_forward(x2, w1, b1, w2, b2, z_dim, tile_b=128)
    jax.block_until_ready((mu2, sigma2))
    mu2_ref, sigma2_ref = _reference(x2, w1, b1, w2, b2, z_dim)
    assert mu2.shape == (B2, z_dim) and sigma2.shape == (B2, z_dim)
    assert jnp.allclose(mu2, mu2_ref, atol=1e-5, rtol=1e-5)
    assert jnp.allclose(sigma2, sigma2_ref, atol=1e-5, rtol=1e-5)
    assert bool(jnp.all(sigma2 > 0.0))

    print("KERNEL_OK")
</pallas_src>

<mosaic_0001>
module attributes {stable_mosaic.version = 11 : i64} {
  func.func @_encoder_kernel(%arg0: i32, %arg1: memref<10x64xf32, #tpu.memory_space<vmem>>, %arg2: memref<64x64xf32, #tpu.memory_space<vmem>>, %arg3: memref<1x64xf32, #tpu.memory_space<vmem>>, %arg4: memref<64x4xf32, #tpu.memory_space<vmem>>, %arg5: memref<1x4xf32, #tpu.memory_space<vmem>>, %arg6: memref<10x4xf32, #tpu.memory_space<vmem>>) attributes {dimension_semantics = [#tpu.dimension_semantics<parallel>], iteration_bounds = array<i64: 1>, scalar_prefetch = 0 : i64, scratch_operands = 0 : i64, tpu.core_type = #tpu.core_type<tc>, window_params = [{transform_indices = @transform_0, window_bounds = array<i64: 10, 64>}, {pipeline_mode = #tpu.pipeline_mode<synchronous>, transform_indices = @transform_1, window_bounds = array<i64: 64, 64>}, {pipeline_mode = #tpu.pipeline_mode<synchronous>, transform_indices = @transform_2, window_bounds = array<i64: 1, 64>}, {pipeline_mode = #tpu.pipeline_mode<synchronous>, transform_indices = @transform_3, window_bounds = array<i64: 64, 4>}, {pipeline_mode = #tpu.pipeline_mode<synchronous>, transform_indices = @transform_4, window_bounds = array<i64: 1, 4>}, {transform_indices = @transform_5, window_bounds = array<i64: 10, 4>}]} {
    %c0 = arith.constant 0 : index
    %c0_0 = arith.constant 0 : index
    %0 = vector.load %arg1[%c0, %c0_0] : memref<10x64xf32, #tpu.memory_space<vmem>>, vector<10x64xf32>
    %c0_1 = arith.constant 0 : index
    %c0_2 = arith.constant 0 : index
    %1 = vector.load %arg2[%c0_1, %c0_2] : memref<64x64xf32, #tpu.memory_space<vmem>>, vector<64x64xf32>
    %cst = arith.constant dense<0.000000e+00> : vector<10x64xf32>
    %2 = tpu.matmul %0, %1, %cst {dimension_numbers = #tpu.dot_dimension_numbers<[1], [0], [0], [1], [0, 0, 1, 1], [], []>} : vector<10x64xf32>, vector<64x64xf32>, vector<10x64xf32> -> vector<10x64xf32>
    %c0_3 = arith.constant 0 : index
    %c0_4 = arith.constant 0 : index
    %3 = vector.load %arg3[%c0_3, %c0_4] : memref<1x64xf32, #tpu.memory_space<vmem>>, vector<1x64xf32>
    %4 = vector.broadcast %3 : vector<1x64xf32> to vector<10x64xf32>
    %5 = arith.addf %2, %4 : vector<10x64xf32>
    %cst_5 = arith.constant 0.000000e+00 : f32
    %6 = vector.broadcast %cst_5 : f32 to vector<10x64xf32>
    %7 = arith.cmpf oge, %5, %6 : vector<10x64xf32>
    %cst_6 = arith.constant 1.000000e-01 : f32
    %8 = vector.broadcast %cst_6 : f32 to vector<10x64xf32>
    %9 = arith.mulf %8, %5 : vector<10x64xf32>
    %10 = arith.select %7, %5, %9 : vector<10x64xi1>, vector<10x64xf32>
    %c0_7 = arith.constant 0 : index
    %c0_8 = arith.constant 0 : index
    %11 = vector.load %arg4[%c0_7, %c0_8] : memref<64x4xf32, #tpu.memory_space<vmem>>, vector<64x4xf32>
    %cst_9 = arith.constant dense<0.000000e+00> : vector<10x4xf32>
    %12 = tpu.matmul %10, %11, %cst_9 {dimension_numbers = #tpu.dot_dimension_numbers<[1], [0], [0], [1], [0, 0, 1, 1], [], []>} : vector<10x64xf32>, vector<64x4xf32>, vector<10x4xf32> -> vector<10x4xf32>
    %c0_10 = arith.constant 0 : index
    %c0_11 = arith.constant 0 : index
    %13 = vector.load %arg5[%c0_10, %c0_11] : memref<1x4xf32, #tpu.memory_space<vmem>>, vector<1x4xf32>
    %14 = vector.broadcast %13 : vector<1x4xf32> to vector<10x4xf32>
    %15 = arith.addf %12, %14 : vector<10x4xf32>
    %16 = tpu.iota {dimensions = array<i32: 1>} : vector<10x4xi32>
    %cst_12 = arith.constant 0.000000e+00 : f32
    %17 = vector.broadcast %cst_12 : f32 to vector<10x4xf32>
    %18 = arith.maximumf %15, %17 : vector<10x4xf32>
    %19 = vector.broadcast %cst_12 : f32 to vector<10x4xf32>
    %20 = arith.subf %15, %19 : vector<10x4xf32>
    %21 = arith.cmpf one, %20, %20 : vector<10x4xf32>
    %22 = vector.broadcast %cst_12 : f32 to vector<10x4xf32>
    %23 = arith.addf %15, %22 : vector<10x4xf32>
    %24 = math.absf %20 : vector<10x4xf32>
    %cst_13 = arith.constant 0.000000e+00 : f32
    %25 = vector.broadcast %cst_13 : f32 to vector<10x4xf32>
    %26 = arith.subf %25, %24 : vector<10x4xf32>
    %27 = math.exp %26 : vector<10x4xf32>
    %28 = math.log1p %27 : vector<10x4xf32>
    %29 = arith.addf %18, %28 : vector<10x4xf32>
    %30 = arith.select %21, %23, %29 : vector<10x4xi1>, vector<10x4xf32>
    %cst_14 = arith.constant 1.000000e-07 : f32
    %31 = vector.broadcast %cst_14 : f32 to vector<10x4xf32>
    %32 = arith.addf %30, %31 : vector<10x4xf32>
    %c2_i32 = arith.constant 2 : i32
    %33 = vector.broadcast %c2_i32 : i32 to vector<10x4xi32>
    %34 = arith.cmpi sge, %16, %33 : vector<10x4xi32>
    %35 = arith.select %34, %32, %15 : vector<10x4xi1>, vector<10x4xf32>
    %c0_15 = arith.constant 0 : index
    %c0_16 = arith.constant 0 : index
    %36 = vector.load %arg6[%c0_15, %c0_16] : memref<10x4xf32, #tpu.memory_space<vmem>>, vector<10x4xf32>
    tpu.vector_store %arg6[%c0_15, %c0_16], %35 {strides = array<i32>} : memref<10x4xf32, #tpu.memory_space<vmem>>, vector<10x4xf32>,
    return
  }
  func.func @transform_0(%arg0: i32) -> (i32, i32) {
    %c0_i32 = arith.constant 0 : i32
    %c0_i32_0 = arith.constant 0 : i32
    return %arg0, %c0_i32 : i32, i32
  }
  func.func @transform_1(%arg0: i32) -> (i32, i32) {
    %c0_i32 = arith.constant 0 : i32
    %c0_i32_0 = arith.constant 0 : i32
    %c0_i32_1 = arith.constant 0 : i32
    return %c0_i32, %c0_i32_0 : i32, i32
  }
  func.func @transform_2(%arg0: i32) -> (i32, i32) {
    %c0_i32 = arith.constant 0 : i32
    %c0_i32_0 = arith.constant 0 : i32
    %c0_i32_1 = arith.constant 0 : i32
    return %c0_i32, %c0_i32_0 : i32, i32
  }
  func.func @transform_3(%arg0: i32) -> (i32, i32) {
    %c0_i32 = arith.constant 0 : i32
    %c0_i32_0 = arith.constant 0 : i32
    %c0_i32_1 = arith.constant 0 : i32
    return %c0_i32, %c0_i32_0 : i32, i32
  }
  func.func @transform_4(%arg0: i32) -> (i32, i32) {
    %c0_i32 = arith.constant 0 : i32
    %c0_i32_0 = arith.constant 0 : i32
    %c0_i32_1 = arith.constant 0 : i32
    return %c0_i32, %c0_i32_0 : i32, i32
  }
  func.func @transform_5(%arg0: i32) -> (i32, i32) {
    %c0_i32 = arith.constant 0 : i32
    %c0_i32_0 = arith.constant 0 : i32
    return %arg0, %c0_i32 : i32, i32
  }
}

</mosaic_0001>

<llo_original>
// kernel: tpu_custom_call.1
$region0: #{tpu_custom_call.1}
  #allocation0 [shape = 'u32[]', space=smem, size = 0x4, offset = 0x4, fixed_abs, tag = 'smem constant byte address 0x4 - core index']
  #allocation1 [shape = 'u32[144,128]{1,0:T(1,128)}', space=vmem, size = 0x12000, scoped, tag = 'internal scratch']
  %s0 = inlined_call_operand.hbm [shape: f32[10,64], index: 0, kind: input, shape index: {}]
  %s1 = inlined_call_operand.vmem [shape: f32[64,64], index: 1, kind: input, shape index: {}]
  %s2 = inlined_call_operand.vmem [shape: f32[1,64], index: 2, kind: input, shape index: {}]
  %s3 = inlined_call_operand.vmem [shape: f32[64,4], index: 3, kind: input, shape index: {}]
  %s4 = inlined_call_operand.vmem [shape: f32[1,4], index: 4, kind: input, shape index: {}]
  %s5 = inlined_call_operand.vmem [shape: f32[10,4], index: 5, kind: output, shape index: {}]
  %s6 = sld [smem:[#allocation0]]
  $region34: #{tpu_custom_call.1} parent=0
    _
  %s8 = ssub.s32 1, %s6
  %s9 = scalar_select 0, %s8, %s6
  $region1: #{tpu_custom_call.1} parent=0
    #allocation2 [shape = 'u8[8192]{0}', space=vmem, size = 0x2000, scoped, tag = 'input window, operand 0, single buffered']
    #allocation3 [shape = 's32[1]{0}', space=sflag, size = 0x4, scoped, tag = 'scoped memory for tpu_custom_call.1']
    %10 = vsyncpa [#allocation3], 0
    // Predicated region
    $region2: #{tpu_custom_call.1} parent=1 // pred_check
      _
    $region3: #{tpu_custom_call.1} parent=1 // pred_check_branch
      %12 = sbr.rel (0) target = $region5
    $region4: #{tpu_custom_call.1} parent=1 // pred_region
      %s14 = ssub.s32 256, 256
      %15 = vsyncadd [#allocation3], %s14
      %s16 = sshll.u32 [#allocation2], 4
      %s17 = int_to_ptr.vmem [resolvable:$true] %s16
      %22 = dma.hbm_to_vmem [thread:$0]  %s0, 256, %s17, [#allocation3], 128, 128, 8
    $region5: #{tpu_custom_call.1} parent=1 // pred_fallthru
      _
    // Predicated region
    $region6: #{tpu_custom_call.1} parent=1 // pred_check
      _
    $region7: #{tpu_custom_call.1} parent=1 // pred_check_branch
      %24 = sbr.rel (0) target = $region9
    $region8: #{tpu_custom_call.1} parent=1 // pred_region
      _
    $region9: #{tpu_custom_call.1} parent=1 // pred_fallthru
      _
    // Predicated region
    $region10: #{tpu_custom_call.1} parent=1 // pred_check
      _
    $region11: #{tpu_custom_call.1} parent=1 // pred_check_branch
      %26 = sbr.rel (0) target = $region13
    $region12: #{tpu_custom_call.1} parent=1 // pred_region
      _
    $region13: #{tpu_custom_call.1} parent=1 // pred_fallthru
      _
    // Predicated region
    $region14: #{tpu_custom_call.1} parent=1 // pred_check
      _
    $region15: #{tpu_custom_call.1} parent=1 // pred_check_branch
      %28 = sbr.rel (0) target = $region17
    $region16: #{tpu_custom_call.1} parent=1 // pred_region
      _
    $region17: #{tpu_custom_call.1} parent=1 // pred_fallthru
      _
    // Predicated region
    $region18: #{tpu_custom_call.1} parent=1 // pred_check
      _
    $region19: #{tpu_custom_call.1} parent=1 // pred_check_branch
      %30 = sbr.rel (0) target = $region21
    $region20: #{tpu_custom_call.1} parent=1 // pred_region
      _
    $region21: #{tpu_custom_call.1} parent=1 // pred_fallthru
      _
    // Predicated region
    $region22: #{tpu_custom_call.1} parent=1 // pred_check
      _
    $region23: #{tpu_custom_call.1} parent=1 // pred_check_branch
      %32 = sbr.rel (0) target = $region25
    $region24: #{tpu_custom_call.1} parent=1 // pred_region
      %33 = dma.done [#allocation3], 256
    $region25: #{tpu_custom_call.1} parent=1 // pred_fallthru
      _
    %v34 = vld [vmem:[#allocation2] sm:$0xff]
    %v35 = vld [vmem:[#allocation2 + $0x8] sm:$0x3]
    %v36 = vld [vmem:[%s1] sm:$0xff]
    %v37 = vld [vmem:[%s1 + $0x8] sm:$0xff]
    %v38 = vld [vmem:[%s1 + $0x10] sm:$0xff]
    %v39 = vld [vmem:[%s1 + $0x18] sm:$0xff]
    %v40 = vld [vmem:[%s1 + $0x20] sm:$0xff]
    %v41 = vld [vmem:[%s1 + $0x28] sm:$0xff]
    %v42 = vld [vmem:[%s1 + $0x30] sm:$0xff]
    %v43 = vld [vmem:[%s1 + $0x38] sm:$0xff]
    %v44 = vld [vmem:[%s2] sm:$0x1]
    %v46 = vlaneseq
    %v47 = vshrl.u32 %v46, 7
    %v48 = vsub.s32 0, %v47
    %v49 = vrot.slane %v44, %v48
    %vm51 = vcmask 523264
    %v53 = vsel %vm51, %v34, 0
    %v56 = vsel %vm51, %v35, 0
    %58 = vmatprep.subr.mxu0 0.0
    %59 = vmatpush1.msra.mxu0 %v36
    %60 = vmatprep.subr.mxu0 0.0
    %61 = vmatpush1.msra.mxu0 %v37
    %62 = vmatprep.subr.mxu0 0.0
    %63 = vmatpush1.msra.mxu0 %v38
    %64 = vmatprep.subr.mxu0 0.0
    %65 = vmatpush1.msra.mxu0 %v39
    %66 = vmatprep.subr.mxu0 0.0
    %67 = vmatpush1.msra.mxu0 %v40
    %68 = vmatprep.subr.mxu0 0.0
    %69 = vmatpush1.msra.mxu0 %v41
    %70 = vmatprep.subr.mxu0 0.0
    %71 = vmatpush1.msra.mxu0 %v42
    %72 = vmatprep.subr.mxu0 0.0
    %73 = vmatpush1.msra.mxu0 %v43
    %74 = vmatprep.subr.mxu0 0.0
    %75 = vmatpush1.msra.mxu0 0.0
    %76 = vmatprep.subr.mxu0 0.0
    %77 = vmatpush1.msra.mxu0 0.0
    %78 = vmatprep.subr.mxu0 0.0
    %79 = vmatpush1.msra.mxu0 0.0
    %80 = vmatprep.subr.mxu0 0.0
    %81 = vmatpush1.msra.mxu0 0.0
    %82 = vmatprep.subr.mxu0 0.0
    %83 = vmatpush1.msra.mxu0 0.0
    %84 = vmatprep.subr.mxu0 0.0
    %85 = vmatpush1.msra.mxu0 0.0
    %86 = vmatprep.subr.mxu0 0.0
    %87 = vmatpush1.msra.mxu0 0.0
    %88 = vmatprep.subr.mxu0 0.0
    %89 = vmatpush1.msra.mxu0 0.0
    %90 = vmatprep.subr.mxu0 0.0
    %91 = vmatpush1.msra.mxu0 0.0
    %92 = vmatprep.subr.mxu0 0.0
    %93 = vmatpush1.msra.mxu0 0.0
    %94 = vmatprep.subr.mxu0 0.0
    %95 = vmatpush1.msra.mxu0 0.0
    %96 = vmatprep.subr.mxu0 0.0
    %97 = vmatpush1.msra.mxu0 0.0
    %98 = vmatprep.subr.mxu0 0.0
    %99 = vmatpush1.msra.mxu0 0.0
    %100 = vmatprep.subr.mxu0 0.0
    %101 = vmatpush1.msra.mxu0 0.0
    %102 = vmatprep.subr.mxu0 0.0
    %103 = vmatpush1.msra.mxu0 0.0
    %104 = vmatprep.subr.mxu0 0.0
    %105 = vmatpush1.msra.mxu0 0.0
    %106 = vmatprep.subr.mxu0 0.0
    %107 = vmatpush1.msra.mxu0 0.0
    %108 = vmatprep.subr.mxu0 0.0
    %109 = vmatpush1.msra.mxu0 0.0
    %110 = vmatprep.subr.mxu0 0.0
    %111 = vmatpush1.msra.mxu0 0.0
    %112 = vmatprep.subr.mxu0 0.0
    %113 = vmatpush1.msra.mxu0 0.0
    %114 = vmatprep.subr.mxu0 0.0
    %115 = vmatpush1.msra.mxu0 0.0
    %116 = vmatprep.subr.mxu0 0.0
    %117 = vmatpush1.msra.mxu0 0.0
    %118 = vmatprep.subr.mxu0 0.0
    %119 = vmatpush1.msra.mxu0 0.0
    %120 = vmatprep.subr.mxu0 0.0
    %121 = vmatpush1.msra.mxu0 0.0
    %122 = vmatprep.mubr.f32.mxu0 0.0
    %123 = vmatmul.mubr.f32.gmra.mrb[0].mxu0 %v53
    %v124 = vpop.f32.mrb[0].mxu0
    %v125 = vadd.f32 %v49, %v124
    %v126 = vpop.f32.mrb[0].mxu0
    %127 = vmatprep.mubr.f32.mxu0 0.0
    %128 = vmatmul.mubr.f32.gmra.mrb[0].mxu0 %v56
    %v129 = vpop.f32.mrb[0].mxu0
    %v130 = vadd.f32 %v49, %v129
    %v131 = vpop.f32.mrb[0].mxu0
    %132 = vdwg.mxu0
    %vm133 = vcmp.ge.f32.partialorder %v125, 0.0
    %vm134 = vcmp.ge.f32.partialorder %v130, 0.0
    %v135 = vmul.f32 %v125, 0.1
    %v136 = vmul.f32 %v130, 0.1
    %v137 = vsel %vm133, %v125, %v135
    %v138 = vsel %vm134, %v130, %v136
    %v139 = vld [vmem:[%s3] sm:$0xff]
    %v140 = vld [vmem:[%s3 + $0x8] sm:$0xff]
    %v141 = vld [vmem:[%s3 + $0x10] sm:$0xff]
    %v142 = vld [vmem:[%s3 + $0x18] sm:$0xff]
    %v143 = vld [vmem:[%s3 + $0x20] sm:$0xff]
    %v144 = vld [vmem:[%s3 + $0x28] sm:$0xff]
    %v145 = vld [vmem:[%s3 + $0x30] sm:$0xff]
    %v146 = vld [vmem:[%s3 + $0x38] sm:$0xff]
    %v147 = vld [vmem:[%s4] sm:$0x1]
    %v149 = vlaneseq
    %v150 = vshrl.u32 %v149, 7
    %v151 = vsub.s32 0, %v150
    %v152 = vrot.slane %v147, %v151
    %v155 = vsel %vm51, %v137, 0
    %v158 = vsel %vm51, %v138, 0
    %160 = vmatprep.subr.mxu0 0.0
    %161 = vmatpush1.msra.mxu0 %v139
    %162 = vmatprep.subr.mxu0 0.0
    %163 = vmatpush1.msra.mxu0 %v140
    %164 = vmatprep.subr.mxu0 0.0
    %165 = vmatpush1.msra.mxu0 %v141
    %166 = vmatprep.subr.mxu0 0.0
    %167 = vmatpush1.msra.mxu0 %v142
    %168 = vmatprep.subr.mxu0 0.0
    %169 = vmatpush1.msra.mxu0 %v143
    %170 = vmatprep.subr.mxu0 0.0
    %171 = vmatpush1.msra.mxu0 %v144
    %172 = vmatprep.subr.mxu0 0.0
    %173 = vmatpush1.msra.mxu0 %v145
    %174 = vmatprep.subr.mxu0 0.0
    %175 = vmatpush1.msra.mxu0 %v146
    %176 = vmatprep.subr.mxu0 0.0
    %177 = vmatpush1.msra.mxu0 0.0
    %178 = vmatprep.subr.mxu0 0.0
    %179 = vmatpush1.msra.mxu0 0.0
    %180 = vmatprep.subr.mxu0 0.0
    %181 = vmatpush1.msra.mxu0 0.0
    %182 = vmatprep.subr.mxu0 0.0
    %183 = vmatpush1.msra.mxu0 0.0
    %184 = vmatprep.subr.mxu0 0.0
    %185 = vmatpush1.msra.mxu0 0.0
    %186 = vmatprep.subr.mxu0 0.0
    %187 = vmatpush1.msra.mxu0 0.0
    %188 = vmatprep.subr.mxu0 0.0
    %189 = vmatpush1.msra.mxu0 0.0
    %190 = vmatprep.subr.mxu0 0.0
    %191 = vmatpush1.msra.mxu0 0.0
    %192 = vmatprep.subr.mxu0 0.0
    %193 = vmatpush1.msra.mxu0 0.0
    %194 = vmatprep.subr.mxu0 0.0
    %195 = vmatpush1.msra.mxu0 0.0
    %196 = vmatprep.subr.mxu0 0.0
    %197 = vmatpush1.msra.mxu0 0.0
    %198 = vmatprep.subr.mxu0 0.0
    %199 = vmatpush1.msra.mxu0 0.0
    %200 = vmatprep.subr.mxu0 0.0
    %201 = vmatpush1.msra.mxu0 0.0
    %202 = vmatprep.subr.mxu0 0.0
    %203 = vmatpush1.msra.mxu0 0.0
    %204 = vmatprep.subr.mxu0 0.0
    %205 = vmatpush1.msra.mxu0 0.0
    %206 = vmatprep.subr.mxu0 0.0
    %207 = vmatpush1.msra.mxu0 0.0
    %208 = vmatprep.subr.mxu0 0.0
    %209 = vmatpush1.msra.mxu0 0.0
    %210 = vmatprep.subr.mxu0 0.0
    %211 = vmatpush1.msra.mxu0 0.0
    %212 = vmatprep.subr.mxu0 0.0
    %213 = vmatpush1.msra.mxu0 0.0
    %214 = vmatprep.subr.mxu0 0.0
    %215 = vmatpush1.msra.mxu0 0.0
    %216 = vmatprep.subr.mxu0 0.0
    %217 = vmatpush1.msra.mxu0 0.0
    %218 = vmatprep.subr.mxu0 0.0
    %219 = vmatpush1.msra.mxu0 0.0
    %220 = vmatprep.subr.mxu0 0.0
    %221 = vmatpush1.msra.mxu0 0.0
    %222 = vmatprep.subr.mxu0 0.0
    %223 = vmatpush1.msra.mxu0 0.0
    %224 = vmatprep.mubr.f32.mxu0 0.0
    %225 = vmatmul.mubr.f32.gmra.mrb[0].mxu0 %v155
    %v226 = vpop.f32.mrb[0].mxu0
    %v227 = vadd.f32 %v152, %v226
    %v228 = vpop.f32.mrb[0].mxu0
    %229 = vmatprep.mubr.f32.mxu0 0.0
    %230 = vmatmul.mubr.f32.gmra.mrb[0].mxu0 %v158
    %v231 = vpop.f32.mrb[0].mxu0
    %v232 = vadd.f32 %v152, %v231
    %v233 = vpop.f32.mrb[0].mxu0
    %234 = vdwg.mxu0
    %v235 = vlaneseq
    %v236 = vand.u32 %v235, 127
    %v237 = vmax.f32 %v227, 0.0
    %v238 = vmax.f32 %v232, 0.0
    %vm239 = vcmp.ne.f32.partialorder %v227, %v227
    %vm240 = vcmp.ne.f32.partialorder %v232, %v232
    %v241 = vadd.f32 %v227, 0.0
    %v242 = vadd.f32 %v232, 0.0
    %v243 = vand.u32 2147483647, %v227
    %v244 = vand.u32 2147483647, %v232
    %v245 = vsub.f32 0.0, %v243
    %v246 = vsub.f32 0.0, %v244
    %v247 = vmul.f32 %v245, 1.442695
    %v248 = vpow.pop %v247
    %v249 = vmul.f32 %v246, 1.442695
    %v250 = vpow.pop %v249
    %v251 = vadd.f32 %v248, 1.0
    %v252 = vlog2.pop %v251
    %v253 = vmul.f32 %v252, 0.6931472
    %v254 = vmul.f32 -0.5, %v248
    %v255 = vadd.f32 %v254, 1.0
    %v256 = vmul.f32 %v255, %v248
    %v257 = vand.u32 2147483647, %v248
    %vm258 = vcmp.lt.f32.partialorder %v257, 0.0004427343
    %v259 = vsel %vm258, %v256, %v253
    %v260 = vadd.f32 %v250, 1.0
    %v261 = vlog2.pop %v260
    %v262 = vmul.f32 %v261, 0.6931472
    %v263 = vmul.f32 -0.5, %v250
    %v264 = vadd.f32 %v263, 1.0
    %v265 = vmul.f32 %v264, %v250
    %v266 = vand.u32 2147483647, %v250
    %vm267 = vcmp.lt.f32.partialorder %v266, 0.0004427343
    %v268 = vsel %vm267, %v265, %v262
    %v269 = vadd.f32 %v237, %v259
    %v270 = vadd.f32 %v238, %v268
    %v271 = vsel %vm239, %v241, %v269
    %v272 = vsel %vm240, %v242, %v270
    %v273 = vadd.f32 %v271, 1e-07
    %v274 = vadd.f32 %v272, 1e-07
    %vm275 = vcmp.ge.s32.totalorder %v236, 2
    %v276 = vsel %vm275, %v273, %v227
    %v277 = vsel %vm275, %v274, %v232
    %vm278 = vcmask 31744
    %279 = vst.msk [vmem:[%s5] sm:$0xff] %vm278, %v276
    %vm280 = vcmask 25600
    %281 = vst.msk [vmem:[%s5 + $0x8] sm:$0x3] %vm280, %v277
    // Predicated region
    $region26: #{tpu_custom_call.1} parent=1 // pred_check
      _
    $region27: #{tpu_custom_call.1} parent=1 // pred_check_branch
      %283 = sbr.rel (0) target = $region29
    $region28: #{tpu_custom_call.1} parent=1 // pred_region
      _
    $region29: #{tpu_custom_call.1} parent=1 // pred_fallthru
      _
    // Predicated region
    $region30: #{tpu_custom_call.1} parent=1 // pred_check
      _
    $region31: #{tpu_custom_call.1} parent=1 // pred_check_branch
      %285 = sbr.rel (0) target = $region33
    $region32: #{tpu_custom_call.1} parent=1 // pred_region
      _
    $region33: #{tpu_custom_call.1} parent=1 // pred_fallthru
      _
    %286 = vsyncpa [#allocation3], 1

</llo_original>
